<compile_context>
chip_gen: v5e
topology: v5e:2x2
jax: 0.10.0
libtpu: 0.0.40
codegen_flags: <defaults>
</compile_context>

<pallas_src>
import numpy as np
import jax
import jax.numpy as jnp
from jax.experimental import pallas as pl
from jax.experimental.pallas import tpu as pltpu


LANES = 128       # lane width of the compute / output slabs
ROW_ALIGN = 32    # keeps (tile_r, 128) legal for f32 (8), bf16 (16) and int8 (32) tiles


def _round_up(x, m):
    return ((x + m - 1) // m) * m


def _make_fa_kernel(approx_recip):
    def _fa_kernel(ev_ref, mask_ref, out_ref):
        """FA for one (tile_r, 128) slab of voxels.

        ev_ref  : (3, tile_r, 128) VMEM  -- channel-major eigenvalues
        mask_ref: (tile_r, 128)    VMEM  -- any dtype, cast in-register
        out_ref : (tile_r, 128)    VMEM
        """
        e1 = ev_ref[0].astype(jnp.float32)
        e2 = ev_ref[1].astype(jnp.float32)
        e3 = ev_ref[2].astype(jnp.float32)

        # all eigenvalues exactly zero -> +1 in the denominator so fa = 0
        # (mirrors the PyTorch `all_zero` term exactly).
        all_zero = jnp.logical_and(jnp.logical_and(e1 == 0.0, e2 == 0.0), e3 == 0.0)
        az = all_zero.astype(jnp.float32)

        d12 = e1 - e2
        d23 = e2 - e3
        d31 = e3 - e1
        num = 0.5 * (d12 * d12 + d23 * d23 + d31 * d31)   # x*x, not abs(x)**p
        denom = e1 * e1 + e2 * e2 + e3 * e3 + az
        if approx_recip:
            # v7x option: keep the EUP divide off the critical path.
            fa = jnp.sqrt(num * pl.reciprocal(denom, approx=True))
        else:
            fa = jnp.sqrt(num / denom)

        out_ref[...] = (fa * mask_ref[...].astype(jnp.float32)).astype(out_ref.dtype)

    return _fa_kernel


def _fa_channel_major(ev_cm, mask_2d, *, tile_rows=2048, out_dtype=jnp.float32,
                      approx_recip=False):
    """Run the FA kernel on channel-major data.

    ev_cm  : (3, rows, 128)  eigenvalue planes (f32 or bf16)
    mask_2d: (rows, 128)     per-voxel mask (any numeric dtype)
    returns: (rows, 128)     fa * mask, in `out_dtype`
    """
    n_ch, rows, lanes = ev_cm.shape
    assert n_ch == 3 and lanes == LANES
    assert mask_2d.shape == (rows, lanes)

    # Largest tile that fits comfortably in VMEM...
    tile_r = min(tile_rows, rows)
    # ...but split the grid into >=2 steps when there is enough work so the
    # "parallel" axis actually shards across both v7x TensorCores.
    if rows > 2 * ROW_ALIGN:
        tile_r = min(tile_r, _round_up(pl.cdiv(rows, 2), ROW_ALIGN))
    # If the block does not cover the whole array, keep it tile-aligned so
    # int8/bf16/f32 BlockSpecs all satisfy their minimum (sublane, 128) tiles.
    if tile_r < rows:
        tile_r = _round_up(tile_r, ROW_ALIGN)
    grid = (pl.cdiv(rows, tile_r),)

    ev_bytes = np.dtype(ev_cm.dtype).itemsize
    mask_bytes = np.dtype(mask_2d.dtype).itemsize
    out_bytes = np.dtype(out_dtype).itemsize

    # Advisory cost estimate (helps XLA schedule around the custom call).
    n_vox = rows * lanes
    cost = pl.CostEstimate(
        flops=20 * n_vox,
        transcendentals=2 * n_vox,
        bytes_accessed=n_vox * (3 * ev_bytes + mask_bytes + out_bytes),
    )

    # Double-buffered VMEM footprint; only raise the scoped limit if a large
    # user-supplied tile would exceed v5e's 16 MiB default.
    block_bytes = tile_r * lanes * (3 * ev_bytes + mask_bytes + out_bytes)
    vmem_needed = 2 * block_bytes + (1 << 20)
    vmem_limit = None
    if vmem_needed > (14 << 20):
        vmem_limit = int(min(vmem_needed + (2 << 20), 48 << 20))

    return pl.pallas_call(
        _make_fa_kernel(approx_recip),
        out_shape=jax.ShapeDtypeStruct((rows, lanes), out_dtype),
        grid=grid,
        in_specs=[
            pl.BlockSpec((3, tile_r, lanes), lambda i: (0, i, 0)),
            pl.BlockSpec((tile_r, lanes), lambda i: (i, 0)),
        ],
        out_specs=pl.BlockSpec((tile_r, lanes), lambda i: (i, 0)),
        compiler_params=pltpu.CompilerParams(
            dimension_semantics=("parallel",),
            vmem_limit_bytes=vmem_limit),
        cost_estimate=cost,
    )(ev_cm, mask_2d)


def fa_module(eigenvals, mask, *, tile_rows=2048, out_dtype=jnp.float32,
              approx_recip=False):
    """Pallas implementation of FAModule.forward. Returns {'fa': ...}."""
    eigenvals = jnp.asarray(eigenvals)
    mask = jnp.asarray(mask)
    *dim, n_ev = eigenvals.shape
    assert n_ev == 3, f"expected last dim = 3 eigenvalues, got {n_ev}"
    dim = tuple(dim)
    n_vox = int(np.prod(dim)) if dim else 1

    # No silent dtype promotion: bf16 eigenvalues stay bf16 end-to-end.
    ev2d = eigenvals.reshape(n_vox, 3)
    mask_flat = mask.reshape(-1)
    assert mask_flat.shape[0] == n_vox, "mask must have one value per voxel"

    # bool masks travel as int8 (1 byte/voxel of HBM traffic); any other dtype
    # is passed through unchanged and cast to f32 inside the kernel.
    if mask_flat.dtype == jnp.bool_:
        mask_flat = mask_flat.astype(jnp.int8)

    # Pad the flat voxel axis to a lane multiple only when ragged; padded
    # voxels are all-zero -> fa = 0 and get sliced off afterwards.
    pad = (-n_vox) % LANES
    if pad:
        ev2d = jnp.pad(ev2d, ((0, pad), (0, 0)))
        mask_flat = jnp.pad(mask_flat, ((0, pad),))
    n_padded = n_vox + pad
    rows = n_padded // LANES

    # Single relayout pass: voxel-major (N, 3) -> channel-major (3, rows, 128)
    # so in-kernel math runs on fully packed vregs and stores are lane-dense.
    # If the producer can supply channel-major eigenvalues directly, call
    # _fa_channel_major and skip this transpose entirely.
    ev_cm = ev2d.T.reshape(3, rows, LANES)
    mask_2d = mask_flat.reshape(rows, LANES)

    fa_2d = _fa_channel_major(ev_cm, mask_2d, tile_rows=tile_rows,
                              out_dtype=out_dtype, approx_recip=approx_recip)

    fa = fa_2d.reshape(n_padded)[:n_vox].reshape(dim + (1,))
    return {'fa': fa}


def fa_reference(eigenvals, mask):
    """Pure-JAX reference mirroring the PyTorch forward exactly."""
    all_zero = jnp.all(eigenvals == 0, axis=-1)
    ev1, ev2, ev3 = eigenvals[..., 0], eigenvals[..., 1], eigenvals[..., 2]
    fa = jnp.sqrt(0.5 * ((ev1 - ev2) ** 2 + (ev2 - ev3) ** 2 + (ev3 - ev1) ** 2)
                  / ((eigenvals * eigenvals).sum(-1) + all_zero))
    return fa[..., None] * mask


if __name__ == "__main__":
    key = jax.random.PRNGKey(0)
    k1, k2, k3, k4, k5, k6 = jax.random.split(key, 6)

    # --- test 1: batch=2, spatial=8x16x16, bool mask (int8 path), rows=32 ---
    dim1 = (2, 8, 16, 16)
    ev1 = jnp.abs(jax.random.normal(k1, dim1 + (3,), dtype=jnp.float32))
    ev1 = ev1.at[0, 0, :4, :4, :].set(0.0)          # exercise the all-zero branch
    m1 = jax.random.uniform(k2, dim1 + (1,)) > 0.2   # bool mask
    fa1 = jax.block_until_ready(fa_module(ev1, m1)['fa'])
    ref1 = jax.block_until_ready(fa_reference(ev1, m1.astype(jnp.float32)))
    np.testing.assert_allclose(np.asarray(fa1), np.asarray(ref1), rtol=1e-5, atol=1e-6)
    assert fa1.shape == dim1 + (1,)

    # --- test 2: larger volume -> grid splits into 2 steps (megacore path) ---
    dim2 = (2, 8, 32, 32)
    ev2 = jnp.abs(jax.random.normal(k3, dim2 + (3,), dtype=jnp.float32))
    m2 = jax.random.uniform(k4, dim2 + (1,)) > 0.1
    fa2 = jax.block_until_ready(fa_module(ev2, m2)['fa'])
    ref2 = jax.block_until_ready(fa_reference(ev2, m2.astype(jnp.float32)))
    np.testing.assert_allclose(np.asarray(fa2), np.asarray(ref2), rtol=1e-5, atol=1e-6)
    assert fa2.shape == dim2 + (1,)

    # --- test 3: ragged voxel count + non-binary float mask ---
    dim3 = (5, 9, 13)
    ev3 = jnp.abs(jax.random.normal(k5, dim3 + (3,), dtype=jnp.float32))
    m3 = jax.random.uniform(k6, dim3 + (1,), dtype=jnp.float32)
    fa3 = jax.block_until_ready(fa_module(ev3, m3)['fa'])
    ref3 = jax.block_until_ready(fa_reference(ev3, m3))
    np.testing.assert_allclose(np.asarray(fa3), np.asarray(ref3), rtol=1e-5, atol=1e-6)
    assert fa3.shape == dim3 + (1,)

    print("KERNEL_OK")
</pallas_src>

<mosaic_0001>
module attributes {stable_mosaic.version = 11 : i64} {
  func.func @_fa_kernel(%arg0: i32, %arg1: memref<3x32x128xf32, #tpu.memory_space<vmem>>, %arg2: memref<32x128xi8, #tpu.memory_space<vmem>>, %arg3: memref<32x128xf32, #tpu.memory_space<vmem>>) attributes {dimension_semantics = [#tpu.dimension_semantics<parallel>], iteration_bounds = array<i64: 1>, scalar_prefetch = 0 : i64, scratch_operands = 0 : i64, tpu.core_type = #tpu.core_type<tc>, window_params = [{transform_indices = @transform_0, window_bounds = array<i64: 3, 32, 128>}, {transform_indices = @transform_1, window_bounds = array<i64: 32, 128>}, {transform_indices = @transform_2, window_bounds = array<i64: 32, 128>}]} {
    %c0 = arith.constant 0 : index
    %c0_0 = arith.constant 0 : index
    %c0_1 = arith.constant 0 : index
    %0 = vector.load %arg1[%c0, %c0_0, %c0_1] : memref<3x32x128xf32, #tpu.memory_space<vmem>>, vector<1x32x128xf32>
    %1 = vector.shape_cast %0 : vector<1x32x128xf32> to vector<32x128xf32>
    %c1 = arith.constant 1 : index
    %c0_2 = arith.constant 0 : index
    %c0_3 = arith.constant 0 : index
    %2 = vector.load %arg1[%c1, %c0_2, %c0_3] : memref<3x32x128xf32, #tpu.memory_space<vmem>>, vector<1x32x128xf32>
    %3 = vector.shape_cast %2 : vector<1x32x128xf32> to vector<32x128xf32>
    %c2 = arith.constant 2 : index
    %c0_4 = arith.constant 0 : index
    %c0_5 = arith.constant 0 : index
    %4 = vector.load %arg1[%c2, %c0_4, %c0_5] : memref<3x32x128xf32, #tpu.memory_space<vmem>>, vector<1x32x128xf32>
    %5 = vector.shape_cast %4 : vector<1x32x128xf32> to vector<32x128xf32>
    %cst = arith.constant 0.000000e+00 : f32
    %6 = vector.broadcast %cst : f32 to vector<32x128xf32>
    %7 = arith.cmpf oeq, %1, %6 : vector<32x128xf32>
    %cst_6 = arith.constant 0.000000e+00 : f32
    %8 = vector.broadcast %cst_6 : f32 to vector<32x128xf32>
    %9 = arith.cmpf oeq, %3, %8 : vector<32x128xf32>
    %10 = arith.andi %7, %9 : vector<32x128xi1>
    %cst_7 = arith.constant 0.000000e+00 : f32
    %11 = vector.broadcast %cst_7 : f32 to vector<32x128xf32>
    %12 = arith.cmpf oeq, %5, %11 : vector<32x128xf32>
    %13 = arith.andi %10, %12 : vector<32x128xi1>
    %14 = arith.extui %13 : vector<32x128xi1> to vector<32x128xi32>
    %15 = arith.sitofp %14 : vector<32x128xi32> to vector<32x128xf32>
    %16 = arith.subf %1, %3 : vector<32x128xf32>
    %17 = arith.subf %3, %5 : vector<32x128xf32>
    %18 = arith.subf %5, %1 : vector<32x128xf32>
    %19 = arith.mulf %16, %16 : vector<32x128xf32>
    %20 = arith.mulf %17, %17 : vector<32x128xf32>
    %21 = arith.addf %19, %20 : vector<32x128xf32>
    %22 = arith.mulf %18, %18 : vector<32x128xf32>
    %23 = arith.addf %21, %22 : vector<32x128xf32>
    %cst_8 = arith.constant 5.000000e-01 : f32
    %24 = vector.broadcast %cst_8 : f32 to vector<32x128xf32>
    %25 = arith.mulf %24, %23 : vector<32x128xf32>
    %26 = arith.mulf %1, %1 : vector<32x128xf32>
    %27 = arith.mulf %3, %3 : vector<32x128xf32>
    %28 = arith.addf %26, %27 : vector<32x128xf32>
    %29 = arith.mulf %5, %5 : vector<32x128xf32>
    %30 = arith.addf %28, %29 : vector<32x128xf32>
    %31 = arith.addf %30, %15 : vector<32x128xf32>
    %32 = arith.divf %25, %31 : vector<32x128xf32>
    %33 = math.sqrt %32 : vector<32x128xf32>
    %c0_9 = arith.constant 0 : index
    %c0_10 = arith.constant 0 : index
    %34 = vector.load %arg2[%c0_9, %c0_10] : memref<32x128xi8, #tpu.memory_space<vmem>>, vector<32x128xi8>
    %35 = arith.sitofp %34 : vector<32x128xi8> to vector<32x128xf32>
    %36 = arith.mulf %33, %35 : vector<32x128xf32>
    %c0_11 = arith.constant 0 : index
    %c0_12 = arith.constant 0 : index
    %37 = vector.load %arg3[%c0_11, %c0_12] : memref<32x128xf32, #tpu.memory_space<vmem>>, vector<32x128xf32>
    tpu.vector_store %arg3[%c0_11, %c0_12], %36 {strides = array<i32>} : memref<32x128xf32, #tpu.memory_space<vmem>>, vector<32x128xf32>,
    return
  }
  func.func @transform_0(%arg0: i32) -> (i32, i32, i32) {
    %c0_i32 = arith.constant 0 : i32
    %c0_i32_0 = arith.constant 0 : i32
    %c0_i32_1 = arith.constant 0 : i32
    return %c0_i32, %arg0, %c0_i32_0 : i32, i32, i32
  }
  func.func @transform_1(%arg0: i32) -> (i32, i32) {
    %c0_i32 = arith.constant 0 : i32
    %c0_i32_0 = arith.constant 0 : i32
    return %arg0, %c0_i32 : i32, i32
  }
  func.func @transform_2(%arg0: i32) -> (i32, i32) {
    %c0_i32 = arith.constant 0 : i32
    %c0_i32_0 = arith.constant 0 : i32
    return %arg0, %c0_i32 : i32, i32
  }
}

</mosaic_0001>

<llo_original>
// kernel: tpu_custom_call.1
$region0: #{tpu_custom_call.1}
  #allocation0 [shape = 'u32[]', space=smem, size = 0x4, offset = 0x4, fixed_abs, tag = 'smem constant byte address 0x4 - core index']
  #allocation1 [shape = 'u32[72,128]{1,0:T(1,128)}', space=vmem, size = 0x9000, scoped, tag = 'internal scratch']
  %s0 = inlined_call_operand.hbm [shape: f32[3,32,128], index: 0, kind: input, shape index: {}]
  %s1 = inlined_call_operand.hbm [shape: s8[32,128], index: 1, kind: input, shape index: {}]
  %s2 = inlined_call_operand.hbm [shape: f32[32,128], index: 2, kind: output, shape index: {}]
  %s3 = sld [smem:[#allocation0]]
  $region26: #{tpu_custom_call.1} parent=0
    _
  %s5 = ssub.s32 1, %s3
  %s6 = scalar_select 0, %s5, %s3
  $region1: #{tpu_custom_call.1} parent=0
    #allocation2 [shape = 'u8[49152]{0}', space=vmem, size = 0xc000, scoped, tag = 'input window, operand 0, single buffered']
    #allocation3 [shape = 's32[1]{0}', space=sflag, size = 0x4, scoped, tag = 'scoped memory for tpu_custom_call.1']
    #allocation4 [shape = 's32[1]{0}', space=sflag, size = 0x4, scoped, tag = 'scoped memory for tpu_custom_call.1']
    #allocation5 [shape = 'u8[4096]{0}', space=vmem, size = 0x1000, scoped, tag = 'input window, operand 1, single buffered']
    #allocation6 [shape = 's32[1]{0}', space=sflag, size = 0x4, scoped, tag = 'scoped memory for tpu_custom_call.1']
    #allocation7 [shape = 'u8[16384]{0}', space=vmem, size = 0x4000, scoped, tag = 'output window, operand 0, single buffered']
    %7 = vsyncpa [#allocation3], 0
    %8 = vsyncpa [#allocation6], 0
    %9 = vsyncpa [#allocation4], 0
    // Predicated region
    $region2: #{tpu_custom_call.1} parent=1 // pred_check
      _
    $region3: #{tpu_custom_call.1} parent=1 // pred_check_branch
      %11 = sbr.rel (0) target = $region5
    $region4: #{tpu_custom_call.1} parent=1 // pred_region
      %13 = vsyncadd [#allocation3], 0
      %s14 = sshll.u32 %s0, 4
      %s15 = int_to_ptr.hbm [resolvable:$true] %s14
      %s16 = sshll.u32 [#allocation2], 4
      %s17 = int_to_ptr.vmem [resolvable:$true] %s16
      %22 = dma.hbm_to_vmem [thread:$0]  %s15, 1536, %s17, [#allocation3], 128, 128, 8
    $region5: #{tpu_custom_call.1} parent=1 // pred_fallthru
      _
    // Predicated region
    $region6: #{tpu_custom_call.1} parent=1 // pred_check
      _
    $region7: #{tpu_custom_call.1} parent=1 // pred_check_branch
      %24 = sbr.rel (0) target = $region9
    $region8: #{tpu_custom_call.1} parent=1 // pred_region
      %26 = vsyncadd [#allocation6], 0
      %s28 = sshll.u32 %s1, 4
      %s29 = int_to_ptr.hbm [resolvable:$true] %s28
      %s30 = sshll.u32 [#allocation5], 4
      %s31 = int_to_ptr.vmem [resolvable:$true] %s30
      %33 = dma.hbm_to_vmem [thread:$0]  %s29, 128, %s31, [#allocation6]
    $region9: #{tpu_custom_call.1} parent=1 // pred_fallthru
      _
    // Predicated region
    $region10: #{tpu_custom_call.1} parent=1 // pred_check
      _
    $region11: #{tpu_custom_call.1} parent=1 // pred_check_branch
      %35 = sbr.rel (0) target = $region13
    $region12: #{tpu_custom_call.1} parent=1 // pred_region
      %37 = dma.done [#allocation3], 1536
    $region13: #{tpu_custom_call.1} parent=1 // pred_fallthru
      _
    // Predicated region
    $region14: #{tpu_custom_call.1} parent=1 // pred_check
      _
    $region15: #{tpu_custom_call.1} parent=1 // pred_check_branch
      %39 = sbr.rel (0) target = $region17
    $region16: #{tpu_custom_call.1} parent=1 // pred_region
      %41 = dma.done [#allocation6], 128
    $region17: #{tpu_custom_call.1} parent=1 // pred_fallthru
      _
    %v42 = vld [vmem:[#allocation2] sm:$0xff]
    %v43 = vld [vmem:[#allocation2 + $0x8] sm:$0xff]
    %v44 = vld [vmem:[#allocation2 + $0x10] sm:$0xff]
    %v45 = vld [vmem:[#allocation2 + $0x18] sm:$0xff]
    %s46 = scalar_lea.vmem [#allocation2], 32
    %v47 = vld [vmem:[%s46] sm:$0xff]
    %v48 = vld [vmem:[%s46 + $0x8] sm:$0xff]
    %v49 = vld [vmem:[%s46 + $0x10] sm:$0xff]
    %v50 = vld [vmem:[%s46 + $0x18] sm:$0xff]
    %s51 = scalar_lea.vmem [#allocation2], 64
    %v52 = vld [vmem:[%s51] sm:$0xff]
    %v53 = vld [vmem:[%s51 + $0x8] sm:$0xff]
    %v54 = vld [vmem:[%s51 + $0x10] sm:$0xff]
    %v55 = vld [vmem:[%s51 + $0x18] sm:$0xff]
    %vm56 = vcmp.eq.f32.partialorder %v42, 0.0
    %vm57 = vcmp.eq.f32.partialorder %v43, 0.0
    %vm58 = vcmp.eq.f32.partialorder %v44, 0.0
    %vm59 = vcmp.eq.f32.partialorder %v45, 0.0
    %vm60 = vcmp.eq.f32.partialorder %v47, 0.0
    %vm61 = vcmp.eq.f32.partialorder %v48, 0.0
    %vm62 = vcmp.eq.f32.partialorder %v49, 0.0
    %vm63 = vcmp.eq.f32.partialorder %v50, 0.0
    %vm64 = vmand %vm56, %vm60
    %vm65 = vmand %vm57, %vm61
    %vm66 = vmand %vm58, %vm62
    %vm67 = vmand %vm59, %vm63
    %vm68 = vcmp.eq.f32.partialorder %v52, 0.0
    %vm69 = vcmp.eq.f32.partialorder %v53, 0.0
    %vm70 = vcmp.eq.f32.partialorder %v54, 0.0
    %vm71 = vcmp.eq.f32.partialorder %v55, 0.0
    %vm72 = vmand %vm64, %vm68
    %vm73 = vmand %vm65, %vm69
    %vm74 = vmand %vm66, %vm70
    %vm75 = vmand %vm67, %vm71
    %v76 = vsel %vm72, 1, 0
    %v77 = vsel %vm73, 1, 0
    %v78 = vsel %vm74, 1, 0
    %v79 = vsel %vm75, 1, 0
    %v80 = vcvt.s32.f32 %v76
    %v81 = vcvt.s32.f32 %v77
    %v82 = vcvt.s32.f32 %v78
    %v83 = vcvt.s32.f32 %v79
    %v84 = vsub.f32 %v42, %v47
    %v85 = vsub.f32 %v43, %v48
    %v86 = vsub.f32 %v44, %v49
    %v87 = vsub.f32 %v45, %v50
    %v88 = vsub.f32 %v47, %v52
    %v89 = vsub.f32 %v48, %v53
    %v90 = vsub.f32 %v49, %v54
    %v91 = vsub.f32 %v50, %v55
    %v92 = vsub.f32 %v52, %v42
    %v93 = vsub.f32 %v53, %v43
    %v94 = vsub.f32 %v54, %v44
    %v95 = vsub.f32 %v55, %v45
    %v96 = vmul.f32 %v84, %v84
    %v97 = vmul.f32 %v85, %v85
    %v98 = vmul.f32 %v86, %v86
    %v99 = vmul.f32 %v87, %v87
    %v100 = vmul.f32 %v88, %v88
    %v101 = vmul.f32 %v89, %v89
    %v102 = vmul.f32 %v90, %v90
    %v103 = vmul.f32 %v91, %v91
    %v104 = vadd.f32 %v96, %v100
    %v105 = vadd.f32 %v97, %v101
    %v106 = vadd.f32 %v98, %v102
    %v107 = vadd.f32 %v99, %v103
    %v108 = vmul.f32 %v92, %v92
    %v109 = vmul.f32 %v93, %v93
    %v110 = vmul.f32 %v94, %v94
    %v111 = vmul.f32 %v95, %v95
    %v112 = vadd.f32 %v104, %v108
    %v113 = vadd.f32 %v105, %v109
    %v114 = vadd.f32 %v106, %v110
    %v115 = vadd.f32 %v107, %v111
    %v116 = vmul.f32 %v112, 0.5
    %v117 = vmul.f32 %v113, 0.5
    %v118 = vmul.f32 %v114, 0.5
    %v119 = vmul.f32 %v115, 0.5
    %v120 = vmul.f32 %v42, %v42
    %v121 = vmul.f32 %v43, %v43
    %v122 = vmul.f32 %v44, %v44
    %v123 = vmul.f32 %v45, %v45
    %v124 = vmul.f32 %v47, %v47
    %v125 = vmul.f32 %v48, %v48
    %v126 = vmul.f32 %v49, %v49
    %v127 = vmul.f32 %v50, %v50
    %v128 = vadd.f32 %v120, %v124
    %v129 = vadd.f32 %v121, %v125
    %v130 = vadd.f32 %v122, %v126
    %v131 = vadd.f32 %v123, %v127
    %v132 = vmul.f32 %v52, %v52
    %v133 = vmul.f32 %v53, %v53
    %v134 = vmul.f32 %v54, %v54
    %v135 = vmul.f32 %v55, %v55
    %v136 = vadd.f32 %v128, %v132
    %v137 = vadd.f32 %v129, %v133
    %v138 = vadd.f32 %v130, %v134
    %v139 = vadd.f32 %v131, %v135
    %v140 = vadd.f32 %v136, %v80
    %v141 = vadd.f32 %v137, %v81
    %v142 = vadd.f32 %v138, %v82
    %v143 = vadd.f32 %v139, %v83
    %v144 = vrcp.pop %v140
    %v145 = vmul.f32 %v140, %v144
    %v146 = vsub.f32 1.0, %v145
    %v147 = vmul.f32 %v144, %v146
    %v148 = vadd.f32 %v144, %v147
    %vm149 = vweird.f32 %v140
    %vm150 = vweird.f32 %v144
    %vm151 = vmor %vm149, %vm150
    %v152 = vsel %vm151, %v144, %v148
    %v153 = vand.u32 2147483647, %v140
    %vm154 = vcmp.eq.f32.partialorder %v153, 8.507059e+37
    %v155 = vand.u32 %v140, 2147483648
    %v156 = vor.u32 1.1754944e-38, %v155
    %v157 = vsel %vm154, %v156, %v152
    %v158 = vmul.f32 %v116, %v157
    %v159 = vrcp.pop %v141
    %v160 = vmul.f32 %v141, %v159
    %v161 = vsub.f32 1.0, %v160
    %v162 = vmul.f32 %v159, %v161
    %v163 = vadd.f32 %v159, %v162
    %vm164 = vweird.f32 %v141
    %vm165 = vweird.f32 %v159
    %vm166 = vmor %vm164, %vm165
    %v167 = vsel %vm166, %v159, %v163
    %v168 = vand.u32 2147483647, %v141
    %vm169 = vcmp.eq.f32.partialorder %v168, 8.507059e+37
    %v170 = vand.u32 %v141, 2147483648
    %v171 = vor.u32 1.1754944e-38, %v170
    %v172 = vsel %vm169, %v171, %v167
    %v173 = vmul.f32 %v117, %v172
    %v174 = vrcp.pop %v142
    %v175 = vmul.f32 %v142, %v174
    %v176 = vsub.f32 1.0, %v175
    %v177 = vmul.f32 %v174, %v176
    %v178 = vadd.f32 %v174, %v177
    %vm179 = vweird.f32 %v142
    %vm180 = vweird.f32 %v174
    %vm181 = vmor %vm179, %vm180
    %v182 = vsel %vm181, %v174, %v178
    %v183 = vand.u32 2147483647, %v142
    %vm184 = vcmp.eq.f32.partialorder %v183, 8.507059e+37
    %v185 = vand.u32 %v142, 2147483648
    %v186 = vor.u32 1.1754944e-38, %v185
    %v187 = vsel %vm184, %v186, %v182
    %v188 = vmul.f32 %v118, %v187
    %v189 = vrcp.pop %v143
    %v190 = vmul.f32 %v143, %v189
    %v191 = vsub.f32 1.0, %v190
    %v192 = vmul.f32 %v189, %v191
    %v193 = vadd.f32 %v189, %v192
    %vm194 = vweird.f32 %v143
    %vm195 = vweird.f32 %v189
    %vm196 = vmor %vm194, %vm195
    %v197 = vsel %vm196, %v189, %v193
    %v198 = vand.u32 2147483647, %v143
    %vm199 = vcmp.eq.f32.partialorder %v198, 8.507059e+37
    %v200 = vand.u32 %v143, 2147483648
    %v201 = vor.u32 1.1754944e-38, %v200
    %v202 = vsel %vm199, %v201, %v197
    %v203 = vmul.f32 %v119, %v202
    %v204 = vrsqrt.pop %v158
    %v205 = vmul.f32 %v204, %v158
    %v206 = vmul.f32 %v205, %v204
    %v207 = vmul.f32 0.5, %v206
    %v208 = vsub.f32 1.5, %v207
    %v209 = vmul.f32 %v204, %v208
    %v210 = vmul.f32 %v158, %v209
    %vm211 = vcmp.eq.f32.partialorder %v158, inf
    %v212 = vsel %vm211, %v158, %v210
    %vm213 = vcmp.eq.f32.partialorder %v158, 0.0
    %v214 = vand.u32 %v158, 2147483648
    %v215 = vsel %vm213, %v214, %v212
    %v216 = vrsqrt.pop %v173
    %v217 = vmul.f32 %v216, %v173
    %v218 = vmul.f32 %v217, %v216
    %v219 = vmul.f32 0.5, %v218
    %v220 = vsub.f32 1.5, %v219
    %v221 = vmul.f32 %v216, %v220
    %v222 = vmul.f32 %v173, %v221
    %vm223 = vcmp.eq.f32.partialorder %v173, inf
    %v224 = vsel %vm223, %v173, %v222
    %vm225 = vcmp.eq.f32.partialorder %v173, 0.0
    %v226 = vand.u32 %v173, 2147483648
    %v227 = vsel %vm225, %v226, %v224
    %v228 = vrsqrt.pop %v188
    %v229 = vmul.f32 %v228, %v188
    %v230 = vmul.f32 %v229, %v228
    %v231 = vmul.f32 0.5, %v230
    %v232 = vsub.f32 1.5, %v231
    %v233 = vmul.f32 %v228, %v232
    %v234 = vmul.f32 %v188, %v233
    %vm235 = vcmp.eq.f32.partialorder %v188, inf
    %v236 = vsel %vm235, %v188, %v234
    %vm237 = vcmp.eq.f32.partialorder %v188, 0.0
    %v238 = vand.u32 %v188, 2147483648
    %v239 = vsel %vm237, %v238, %v236
    %v240 = vrsqrt.pop %v203
    %v241 = vmul.f32 %v240, %v203
    %v242 = vmul.f32 %v241, %v240
    %v243 = vmul.f32 0.5, %v242
    %v244 = vsub.f32 1.5, %v243
    %v245 = vmul.f32 %v240, %v244
    %v246 = vmul.f32 %v203, %v245
    %vm247 = vcmp.eq.f32.partialorder %v203, inf
    %v248 = vsel %vm247, %v203, %v246
    %vm249 = vcmp.eq.f32.partialorder %v203, 0.0
    %v250 = vand.u32 %v203, 2147483648
    %v251 = vsel %vm249, %v250, %v248
    %v252 = vld [vmem:[#allocation5] sm:$0xff]
    %v253 = vunpack.c.0.s8 %v252
    %v254 = vunpack.c.1.s8 %v252
    %v255 = vunpack.c.2.s8 %v252
    %v256 = vunpack.c.3.s8 %v252
    %v257 = vcvt.s32.f32 %v253
    %v258 = vcvt.s32.f32 %v254
    %v259 = vcvt.s32.f32 %v255
    %v260 = vcvt.s32.f32 %v256
    %v261 = vmul.f32 %v215, %v257
    %v262 = vmul.f32 %v227, %v258
    %v263 = vmul.f32 %v239, %v259
    %v264 = vmul.f32 %v251, %v260
    %265 = vst [vmem:[#allocation7] sm:$0xff] %v261
    %266 = vst [vmem:[#allocation7 + $0x8] sm:$0xff] %v262
    %267 = vst [vmem:[#allocation7 + $0x10] sm:$0xff] %v263
    %268 = vst [vmem:[#allocation7 + $0x18] sm:$0xff] %v264
    // Predicated region
    $region18: #{tpu_custom_call.1} parent=1 // pred_check
      _
    $region19: #{tpu_custom_call.1} parent=1 // pred_check_branch
      %270 = sbr.rel (0) target = $region21
    $region20: #{tpu_custom_call.1} parent=1 // pred_region
      %272 = vsyncadd [#allocation4], 0
      %s273 = sshll.u32 [#allocation7], 4
      %s274 = int_to_ptr.vmem [resolvable:$true] %s273
      %s275 = sshll.u32 %s2, 4
      %s276 = int_to_ptr.hbm [resolvable:$true] %s275
      %281 = dma.vmem_to_hbm [thread:$0]  %s274, 512, %s276, [#allocation4], 128, 128, 8
    $region21: #{tpu_custom_call.1} parent=1 // pred_fallthru
      _
    // Predicated region
    $region22: #{tpu_custom_call.1} parent=1 // pred_check
      _
    $region23: #{tpu_custom_call.1} parent=1 // pred_check_branch
      %283 = sbr.rel (0) target = $region25
    $region24: #{tpu_custom_call.1} parent=1 // pred_region
      %285 = dma.done [#allocation4], 512
    $region25: #{tpu_custom_call.1} parent=1 // pred_fallthru
      _
    %286 = vsyncpa [#allocation3], 1
    %287 = vsyncpa [#allocation6], 1
    %288 = vsyncpa [#allocation4], 1

</llo_original>
